<compile_context>
chip_gen: v7x
topology: tpu7x:2x2x1
jax: 0.10.0
libtpu: 0.0.40
codegen_flags: <defaults>
</compile_context>

<pallas_src>
import functools

import jax
import jax.numpy as jnp
import numpy as np
from jax import lax
from jax.experimental import pallas as pl
from jax.experimental.pallas import tpu as pltpu

# GaussActivation(1.1, 2.0, 1.0, 1.0) parameters after the clamps its forward applies.
GA_A = float(np.clip(1.1, 1.01, 6.0))
GA_MU = float(np.clip(2.0, 0.1, 3.0))
GA_S1 = float(np.clip(1.0, 0.5, 2.0))
GA_S2 = float(np.clip(1.0, 0.5, 2.0))
MASK_ALPHA = 0.8      # MaskUpdate(0.8): relu(x) ** 0.8
LEAKY_SLOPE = 0.2     # ForwardAttention default activ='leaky'


def _round_up(x, m):
    return ((x + m - 1) // m) * m


def _fwd_attn_kernel(rows_ref, w_ref, out_ref, *, cout):
    """rows: (tm, Kp) bf16, w: (Kp, 2*cout) bf16, out: (tm, 4*cout) f32."""
    # One fused MXU matmul does conv(inputFeatures) AND maskConv(inputMasks).
    acc = jnp.dot(rows_ref[...], w_ref[...], preferred_element_type=jnp.float32)
    convF = acc[:, :cout]          # conv(inputFeatures)
    maskF = acc[:, cout:]          # maskConv(inputMasks)

    # GaussActivation (asymmetric gaussian around mu).
    d = maskF - GA_MU
    d2 = d * d
    left = GA_A * jnp.exp(-GA_S1 * d2)
    right = 1.0 + (GA_A - 1.0) * jnp.exp(-GA_S2 * d2)
    mact = jnp.where(maskF < GA_MU, left, right)

    # convOut = convFeatures * maskActiv
    convOut = convF * mact

    # MaskUpdate: relu(maskF) ** alpha  (guard log(0) in the pow lowering)
    r = jnp.maximum(maskF, 0.0)
    mup = jnp.where(r > 0.0,
                    jnp.exp(MASK_ALPHA * jnp.log(jnp.maximum(r, 1e-30))),
                    0.0)

    # LeakyReLU(0.2) on the gated features.
    feat = jnp.where(convOut >= 0.0, convOut, LEAKY_SLOPE * convOut)

    # Pack all four outputs into one lane-dense slab -> full-lane stores.
    out_ref[...] = jnp.concatenate([feat, mup, convF, mact], axis=-1)


def _im2col_rows(x, k, stride, pad):
    """x: (N, C, H, W) -> rows (N*Ho*Wo, C*k*k), channel-major / (kh,kw)-minor."""
    N, C, _, _ = x.shape
    patches = lax.conv_general_dilated_patches(
        x, (k, k), (stride, stride), [(pad, pad), (pad, pad)],
        dimension_numbers=('NCHW', 'OIHW', 'NHWC'))
    _, Ho, Wo, _ = patches.shape
    return patches.reshape(N * Ho * Wo, C * k * k), (N, Ho, Wo)


def forward_attention(input_features, input_masks, w_conv, w_mask,
                      kernel=4, stride=2, pad=1, tm=1024,
                      mm_dtype=jnp.bfloat16):
    """Returns (features, maskUpdated, convPreF, maskActiv), all NCHW float32."""
    # Cast to the matmul dtype BEFORE patch extraction so the kernel sees
    # exactly the bf16 values a bf16 conv would see (extraction is exact).
    xf = input_features.astype(mm_dtype)
    xm = input_masks.astype(mm_dtype)
    rows_f, (N, Ho, Wo) = _im2col_rows(xf, kernel, stride, pad)
    rows_m, _ = _im2col_rows(xm, kernel, stride, pad)

    Cout = w_conv.shape[0]
    K1 = rows_f.shape[1]
    K2 = rows_m.shape[1]
    K = K1 + K2
    Kp = _round_up(K, 128)            # lane-dense K for the fused matmul

    # PyTorch weight (O, I, kh, kw) -> (I*kh*kw, O), matching im2col ordering.
    wf = jnp.asarray(w_conv, jnp.float32).transpose(1, 2, 3, 0).reshape(K1, Cout)
    wm = jnp.asarray(w_mask, jnp.float32).transpose(1, 2, 3, 0).reshape(K2, Cout)

    # Block-diagonal fused weight: one (Kp x 2*Cout) matmul does both convs.
    w_comb = jnp.zeros((Kp, 2 * Cout), mm_dtype)
    w_comb = w_comb.at[:K1, :Cout].set(wf.astype(mm_dtype))
    w_comb = w_comb.at[K1:K, Cout:].set(wm.astype(mm_dtype))

    M = rows_f.shape[0]
    tm = max(16, min(int(tm), _round_up(M, 16)))
    tm = _round_up(tm, 16)            # bf16 sublane packing friendliness
    Mp = _round_up(M, tm)

    rows = jnp.concatenate([rows_f, rows_m], axis=1)          # (M, K)
    rows = jnp.pad(rows, ((0, Mp - M), (0, Kp - K)))           # (Mp, Kp)

    kernel_fn = functools.partial(_fwd_attn_kernel, cout=Cout)

    packed = pl.pallas_call(
        kernel_fn,
        out_shape=jax.ShapeDtypeStruct((Mp, 4 * Cout), jnp.float32),
        grid_spec=pltpu.PrefetchScalarGridSpec(
            num_scalar_prefetch=0,
            grid=(Mp // tm,),
            in_specs=[pl.BlockSpec((tm, Kp), lambda i: (i, 0)),
                      pl.BlockSpec((Kp, 2 * Cout), lambda i: (0, 0))],
            out_specs=pl.BlockSpec((tm, 4 * Cout), lambda i: (i, 0)),
        ),
        compiler_params=pltpu.CompilerParams(
            dimension_semantics=("parallel",),      # megacore-shards M on v7x
            vmem_limit_bytes=32 * 1024 * 1024),     # v7x-safe (64 MiB physical)
    )(rows, w_comb)

    packed = packed[:M].reshape(N, Ho, Wo, 4 * Cout)

    def to_nchw(lo, hi):
        return packed[..., lo:hi].transpose(0, 3, 1, 2)

    feat = to_nchw(0, Cout)
    mup = to_nchw(Cout, 2 * Cout)
    convF = to_nchw(2 * Cout, 3 * Cout)
    mact = to_nchw(3 * Cout, 4 * Cout)
    return feat, mup, convF, mact


# ---------------------------- pure-JAX reference ----------------------------
def _conv2d_ref(x, w, stride, pad):
    # bf16 inputs + f32 accumulation, mirroring the kernel's matmul precision.
    return lax.conv_general_dilated(
        x.astype(jnp.bfloat16), w.astype(jnp.bfloat16),
        (stride, stride), [(pad, pad), (pad, pad)],
        dimension_numbers=('NCHW', 'OIHW', 'NCHW'),
        preferred_element_type=jnp.float32)


def _forward_attention_ref(x, m, w_conv, w_mask, kernel=4, stride=2, pad=1):
    convF = _conv2d_ref(x, w_conv, stride, pad)
    maskF = _conv2d_ref(m, w_mask, stride, pad)
    d2 = (maskF - GA_MU) ** 2
    mact = jnp.where(maskF < GA_MU,
                     GA_A * jnp.exp(-GA_S1 * d2),
                     1.0 + (GA_A - 1.0) * jnp.exp(-GA_S2 * d2))
    convOut = convF * mact
    mup = jnp.power(jnp.maximum(maskF, 0.0), MASK_ALPHA)
    feat = jnp.where(convOut >= 0.0, convOut, LEAKY_SLOPE * convOut)
    return feat, mup, convF, mact


if __name__ == "__main__":
    # ForwardAttention(inputChannels=4, outputChannels=32, sample='down-4', activ='leaky')
    N, Cin, H, W = 2, 4, 16, 16
    Cmask = 3          # inputChannels == 4  =>  maskConv takes 3 channels
    Cout = 32
    K = 4

    key = jax.random.PRNGKey(0)
    k1, k2, k3, k4 = jax.random.split(key, 4)
    # Deterministic synthetic "gaussian(0, 0.02)" style init (weights_init()).
    w_conv = 0.02 * jax.random.normal(k1, (Cout, Cin, K, K), dtype=jnp.float32)
    w_mask = 0.02 * jax.random.normal(k2, (Cout, Cmask, K, K), dtype=jnp.float32)
    input_features = jax.random.normal(k3, (N, Cin, H, W), dtype=jnp.float32)
    input_masks = jax.random.uniform(k4, (N, Cmask, H, W), dtype=jnp.float32)

    outs = forward_attention(input_features, input_masks, w_conv, w_mask)
    outs = jax.block_until_ready(outs)

    refs = _forward_attention_ref(input_features, input_masks, w_conv, w_mask)
    refs = jax.block_until_ready(refs)
    for o, r in zip(outs, refs):
        np.testing.assert_allclose(np.asarray(o), np.asarray(r),
                                   rtol=1e-3, atol=1e-4)

    print("KERNEL_OK")
</pallas_src>

<mosaic_0001>
module attributes {stable_mosaic.version = 11 : i64} {
  func.func @_fwd_attn_kernel(%arg0: i32, %arg1: memref<128x128xbf16, #tpu.memory_space<vmem>>, %arg2: memref<128x64xbf16, #tpu.memory_space<vmem>>, %arg3: memref<128x128xf32, #tpu.memory_space<vmem>>) attributes {dimension_semantics = [#tpu.dimension_semantics<parallel>], iteration_bounds = array<i64: 1>, scalar_prefetch = 0 : i64, scratch_operands = 0 : i64, tpu.core_type = #tpu.core_type<tc>, window_params = [{transform_indices = @transform_0, window_bounds = array<i64: 128, 128>}, {pipeline_mode = #tpu.pipeline_mode<synchronous>, transform_indices = @transform_1, window_bounds = array<i64: 128, 64>}, {transform_indices = @transform_2, window_bounds = array<i64: 128, 128>}]} {
    %c0 = arith.constant 0 : index
    %c0_0 = arith.constant 0 : index
    %0 = vector.load %arg1[%c0, %c0_0] : memref<128x128xbf16, #tpu.memory_space<vmem>>, vector<128x128xbf16>
    %c0_1 = arith.constant 0 : index
    %c0_2 = arith.constant 0 : index
    %1 = vector.load %arg2[%c0_1, %c0_2] : memref<128x64xbf16, #tpu.memory_space<vmem>>, vector<128x64xbf16>
    %cst = arith.constant dense<0.000000e+00> : vector<128x64xf32>
    %2 = tpu.matmul %0, %1, %cst {dimension_numbers = #tpu.dot_dimension_numbers<[1], [0], [0], [1], [0, 0, 1, 1], [], []>} : vector<128x128xbf16>, vector<128x64xbf16>, vector<128x64xf32> -> vector<128x64xf32>
    %3 = vector.extract_strided_slice %2 {offsets = [0, 0], sizes = [128, 32], strides = [1, 1]} : vector<128x64xf32> to vector<128x32xf32>
    %4 = vector.extract_strided_slice %2 {offsets = [0, 32], sizes = [128, 32], strides = [1, 1]} : vector<128x64xf32> to vector<128x32xf32>
    %cst_3 = arith.constant 2.000000e+00 : f32
    %5 = vector.broadcast %cst_3 : f32 to vector<128x32xf32>
    %6 = arith.subf %4, %5 : vector<128x32xf32>
    %7 = arith.mulf %6, %6 : vector<128x32xf32>
    %cst_4 = arith.constant -1.000000e+00 : f32
    %8 = vector.broadcast %cst_4 : f32 to vector<128x32xf32>
    %9 = arith.mulf %8, %7 : vector<128x32xf32>
    %10 = math.exp %9 : vector<128x32xf32>
    %cst_5 = arith.constant 1.100000e+00 : f32
    %11 = vector.broadcast %cst_5 : f32 to vector<128x32xf32>
    %12 = arith.mulf %11, %10 : vector<128x32xf32>
    %cst_6 = arith.constant -1.000000e+00 : f32
    %13 = vector.broadcast %cst_6 : f32 to vector<128x32xf32>
    %14 = arith.mulf %13, %7 : vector<128x32xf32>
    %15 = math.exp %14 : vector<128x32xf32>
    %cst_7 = arith.constant 1.000000e-01 : f32
    %16 = vector.broadcast %cst_7 : f32 to vector<128x32xf32>
    %17 = arith.mulf %16, %15 : vector<128x32xf32>
    %cst_8 = arith.constant 1.000000e+00 : f32
    %18 = vector.broadcast %cst_8 : f32 to vector<128x32xf32>
    %19 = arith.addf %18, %17 : vector<128x32xf32>
    %cst_9 = arith.constant 2.000000e+00 : f32
    %20 = vector.broadcast %cst_9 : f32 to vector<128x32xf32>
    %21 = arith.cmpf olt, %4, %20 : vector<128x32xf32>
    %22 = arith.select %21, %12, %19 : vector<128x32xi1>, vector<128x32xf32>
    %23 = arith.mulf %3, %22 : vector<128x32xf32>
    %cst_10 = arith.constant 0.000000e+00 : f32
    %24 = vector.broadcast %cst_10 : f32 to vector<128x32xf32>
    %25 = arith.maximumf %4, %24 : vector<128x32xf32>
    %cst_11 = arith.constant 0.000000e+00 : f32
    %26 = vector.broadcast %cst_11 : f32 to vector<128x32xf32>
    %27 = arith.cmpf ogt, %25, %26 : vector<128x32xf32>
    %cst_12 = arith.constant 1.000000e-30 : f32
    %28 = vector.broadcast %cst_12 : f32 to vector<128x32xf32>
    %29 = arith.maximumf %25, %28 : vector<128x32xf32>
    %30 = math.log %29 : vector<128x32xf32>
    %cst_13 = arith.constant 8.000000e-01 : f32
    %31 = vector.broadcast %cst_13 : f32 to vector<128x32xf32>
    %32 = arith.mulf %31, %30 : vector<128x32xf32>
    %33 = math.exp %32 : vector<128x32xf32>
    %cst_14 = arith.constant 0.000000e+00 : f32
    %34 = vector.broadcast %cst_14 : f32 to vector<128x32xf32>
    %35 = arith.select %27, %33, %34 : vector<128x32xi1>, vector<128x32xf32>
    %cst_15 = arith.constant 0.000000e+00 : f32
    %36 = vector.broadcast %cst_15 : f32 to vector<128x32xf32>
    %37 = arith.cmpf oge, %23, %36 : vector<128x32xf32>
    %cst_16 = arith.constant 2.000000e-01 : f32
    %38 = vector.broadcast %cst_16 : f32 to vector<128x32xf32>
    %39 = arith.mulf %38, %23 : vector<128x32xf32>
    %40 = arith.select %37, %23, %39 : vector<128x32xi1>, vector<128x32xf32>
    %41 = tpu.concatenate %40, %35, %3, %22 in 1 : vector<128x32xf32>, vector<128x32xf32>, vector<128x32xf32>, vector<128x32xf32> -> vector<128x128xf32>
    %c0_17 = arith.constant 0 : index
    %c0_18 = arith.constant 0 : index
    %42 = vector.load %arg3[%c0_17, %c0_18] : memref<128x128xf32, #tpu.memory_space<vmem>>, vector<128x128xf32>
    tpu.vector_store %arg3[%c0_17, %c0_18], %41 {strides = array<i32>} : memref<128x128xf32, #tpu.memory_space<vmem>>, vector<128x128xf32>,
    return
  }
  func.func @transform_0(%arg0: i32) -> (i32, i32) {
    %c0_i32 = arith.constant 0 : i32
    %c0_i32_0 = arith.constant 0 : i32
    return %arg0, %c0_i32 : i32, i32
  }
  func.func @transform_1(%arg0: i32) -> (i32, i32) {
    %c0_i32 = arith.constant 0 : i32
    %c0_i32_0 = arith.constant 0 : i32
    %c0_i32_1 = arith.constant 0 : i32
    return %c0_i32, %c0_i32_0 : i32, i32
  }
  func.func @transform_2(%arg0: i32) -> (i32, i32) {
    %c0_i32 = arith.constant 0 : i32
    %c0_i32_0 = arith.constant 0 : i32
    return %arg0, %c0_i32 : i32, i32
  }
}

</mosaic_0001>

<llo_original>
// kernel: tpu_custom_call.1
$region0: #{tpu_custom_call.1}
  #allocation0 [shape = 'u32[]', space=smem, size = 0x4, offset = 0x4, fixed_abs, tag = 'smem constant byte address 0x4 - core index']
  #allocation1 [shape = 'u32[144,128]{1,0:T(1,128)}', space=vmem, size = 0x12000, scoped, tag = 'internal scratch']
  %s0 = inlined_call_operand.vmem [shape: bf16[128,128], index: 0, kind: input, shape index: {}]
  %s1 = inlined_call_operand.vmem [shape: bf16[128,64], index: 1, kind: input, shape index: {}]
  %s2 = inlined_call_operand.hbm [shape: f32[128,128], index: 2, kind: output, shape index: {}]
  %s3 = sld [smem:[#allocation0]]
  $region18: #{tpu_custom_call.1} parent=0
    _
  %s5 = ssub.s32 1, %s3
  %s6 = scalar_select 0, %s5, %s3
  $region1: #{tpu_custom_call.1} parent=0
    #allocation2 [shape = 'u8[65536]{0}', space=vmem, size = 0x10000, scoped, tag = 'output window, operand 0, single buffered']
    #allocation3 [shape = 's32[1]{0}', space=sflag, size = 0x4, scoped, tag = 'scoped memory for tpu_custom_call.1']
    %7 = vsyncpa [#allocation3], 0
    // Predicated region
    $region2: #{tpu_custom_call.1} parent=1 // pred_check
      _
    $region3: #{tpu_custom_call.1} parent=1 // pred_check_branch
      %9 = sbr.rel (0) target = $region5
    $region4: #{tpu_custom_call.1} parent=1 // pred_region
      _
    $region5: #{tpu_custom_call.1} parent=1 // pred_fallthru
      _
    // Predicated region
    $region6: #{tpu_custom_call.1} parent=1 // pred_check
      _
    $region7: #{tpu_custom_call.1} parent=1 // pred_check_branch
      %11 = sbr.rel (0) target = $region9
    $region8: #{tpu_custom_call.1} parent=1 // pred_region
      _
    $region9: #{tpu_custom_call.1} parent=1 // pred_fallthru
      _
    %v13 = vld [vmem:[%s0] sm:$0xf]
    %v14 = vld [vmem:[%s0 + $0x4] sm:$0xf]
    %v15 = vld [vmem:[%s0 + $0x8] sm:$0xf]
    %v16 = vld [vmem:[%s0 + $0xc] sm:$0xf]
    %v17 = vld [vmem:[%s0 + $0x10] sm:$0xf]
    %v18 = vld [vmem:[%s0 + $0x14] sm:$0xf]
    %v19 = vld [vmem:[%s0 + $0x18] sm:$0xf]
    %v20 = vld [vmem:[%s0 + $0x1c] sm:$0xf]
    %v21 = vld [vmem:[%s0 + $0x20] sm:$0xf]
    %v22 = vld [vmem:[%s0 + $0x24] sm:$0xf]
    %v23 = vld [vmem:[%s0 + $0x28] sm:$0xf]
    %v24 = vld [vmem:[%s0 + $0x2c] sm:$0xf]
    %v25 = vld [vmem:[%s0 + $0x30] sm:$0xf]
    %v26 = vld [vmem:[%s0 + $0x34] sm:$0xf]
    %v27 = vld [vmem:[%s0 + $0x38] sm:$0xf]
    %v28 = vld [vmem:[%s0 + $0x3c] sm:$0xf]
    %v29 = vld [vmem:[%s1] sm:$0xf]
    %v30 = vld [vmem:[%s1 + $0x4] sm:$0xf]
    %v31 = vld [vmem:[%s1 + $0x8] sm:$0xf]
    %v32 = vld [vmem:[%s1 + $0xc] sm:$0xf]
    %v33 = vld [vmem:[%s1 + $0x10] sm:$0xf]
    %v34 = vld [vmem:[%s1 + $0x14] sm:$0xf]
    %v35 = vld [vmem:[%s1 + $0x18] sm:$0xf]
    %v36 = vld [vmem:[%s1 + $0x1c] sm:$0xf]
    %v37 = vld [vmem:[%s1 + $0x20] sm:$0xf]
    %v38 = vld [vmem:[%s1 + $0x24] sm:$0xf]
    %v39 = vld [vmem:[%s1 + $0x28] sm:$0xf]
    %v40 = vld [vmem:[%s1 + $0x2c] sm:$0xf]
    %v41 = vld [vmem:[%s1 + $0x30] sm:$0xf]
    %v42 = vld [vmem:[%s1 + $0x34] sm:$0xf]
    %v43 = vld [vmem:[%s1 + $0x38] sm:$0xf]
    %v44 = vld [vmem:[%s1 + $0x3c] sm:$0xf]
    %v61 = vunpack.c.l.b16 %v13
    %v62 = vunpack.c.l.b16 %v14
    %v63 = vunpack.c.l.b16 %v15
    %v64 = vunpack.c.l.b16 %v16
    %v65 = vunpack.c.l.b16 %v17
    %v66 = vunpack.c.l.b16 %v18
    %v67 = vunpack.c.l.b16 %v19
    %v68 = vunpack.c.l.b16 %v20
    %v69 = vunpack.c.l.b16 %v21
    %v70 = vunpack.c.l.b16 %v22
    %v71 = vunpack.c.l.b16 %v23
    %v72 = vunpack.c.l.b16 %v24
    %v73 = vunpack.c.l.b16 %v25
    %v74 = vunpack.c.l.b16 %v26
    %v75 = vunpack.c.l.b16 %v27
    %v76 = vunpack.c.l.b16 %v28
    %v77 = vpack.c.b16 %v62, %v61
    %v78 = vpack.c.b16 %v64, %v63
    %v79 = vpack.c.b16 %v66, %v65
    %v80 = vpack.c.b16 %v68, %v67
    %v81 = vpack.c.b16 %v70, %v69
    %v82 = vpack.c.b16 %v72, %v71
    %v83 = vpack.c.b16 %v74, %v73
    %v84 = vpack.c.b16 %v76, %v75
    %v109 = vunpack.c.l.b16 %v29
    %v110 = vunpack.c.l.b16 %v30
    %v111 = vunpack.c.l.b16 %v31
    %v112 = vunpack.c.l.b16 %v32
    %v113 = vunpack.c.l.b16 %v33
    %v114 = vunpack.c.l.b16 %v34
    %v115 = vunpack.c.l.b16 %v35
    %v116 = vunpack.c.l.b16 %v36
    %v117 = vunpack.c.l.b16 %v37
    %v118 = vunpack.c.l.b16 %v38
    %v119 = vunpack.c.l.b16 %v39
    %v120 = vunpack.c.l.b16 %v40
    %v121 = vunpack.c.l.b16 %v41
    %v122 = vunpack.c.l.b16 %v42
    %v123 = vunpack.c.l.b16 %v43
    %v124 = vunpack.c.l.b16 %v44
    %v125 = vpack.c.b16 %v110, %v109
    %v126 = vpack.c.b16 %v112, %v111
    %v127 = vpack.c.b16 %v114, %v113
    %v128 = vpack.c.b16 %v116, %v115
    %v129 = vpack.c.b16 %v118, %v117
    %v130 = vpack.c.b16 %v120, %v119
    %v131 = vpack.c.b16 %v122, %v121
    %v132 = vpack.c.b16 %v124, %v123
    %141 = vmatprep.subr.bf16.mxu0 0
    %142 = vmatpush1.bf16.msra.mxu0 %v125
    %143 = vmatprep.subr.bf16.mxu0 0
    %144 = vmatpush1.bf16.msra.mxu0 %v126
    %145 = vmatprep.subr.bf16.mxu0 0
    %146 = vmatpush1.bf16.msra.mxu0 %v127
    %147 = vmatprep.subr.bf16.mxu0 0
    %148 = vmatpush1.bf16.msra.mxu0 %v128
    %149 = vmatprep.subr.bf16.mxu0 0
    %150 = vmatpush1.bf16.msra.mxu0 %v129
    %151 = vmatprep.subr.bf16.mxu0 0
    %152 = vmatpush1.bf16.msra.mxu0 %v130
    %153 = vmatprep.subr.bf16.mxu0 0
    %154 = vmatpush1.bf16.msra.mxu0 %v131
    %155 = vmatprep.subr.bf16.mxu0 0
    %156 = vmatpush1.bf16.msra.mxu0 %v132
    %157 = vmatprep.subr.bf16.mxu0 0
    %158 = vmatpush1.bf16.msra.mxu0 0
    %159 = vmatprep.subr.bf16.mxu0 0
    %160 = vmatpush1.bf16.msra.mxu0 0
    %161 = vmatprep.subr.bf16.mxu0 0
    %162 = vmatpush1.bf16.msra.mxu0 0
    %163 = vmatprep.subr.bf16.mxu0 0
    %164 = vmatpush1.bf16.msra.mxu0 0
    %165 = vmatprep.subr.bf16.mxu0 0
    %166 = vmatpush1.bf16.msra.mxu0 0
    %167 = vmatprep.subr.bf16.mxu0 0
    %168 = vmatpush1.bf16.msra.mxu0 0
    %169 = vmatprep.subr.bf16.mxu0 0
    %170 = vmatpush1.bf16.msra.mxu0 0
    %171 = vmatprep.subr.bf16.mxu0 0
    %172 = vmatpush1.bf16.msra.mxu0 0
    %173 = vmatprep.mubr.bf16.mxu0 0
    %174 = vmatmul.mubr.bf16.gmra.mrb[0].mxu0 %v77
    %v175 = vpop.f32.mrb[0].mxu0
    %v176 = vadd.f32 0.0, %v175
    %v177 = vpop.f32.mrb[0].mxu0
    %v178 = vpop.f32.mrb[0].mxu0
    %v179 = vadd.f32 0.0, %v178
    %v180 = vpop.f32.mrb[0].mxu0
    %181 = vmatprep.mubr.bf16.mxu0 0
    %182 = vmatmul.mubr.bf16.gmra.mrb[0].mxu0 %v78
    %v183 = vpop.f32.mrb[0].mxu0
    %v184 = vadd.f32 0.0, %v183
    %v185 = vpop.f32.mrb[0].mxu0
    %v186 = vpop.f32.mrb[0].mxu0
    %v187 = vadd.f32 0.0, %v186
    %v188 = vpop.f32.mrb[0].mxu0
    %189 = vmatprep.mubr.bf16.mxu0 0
    %190 = vmatmul.mubr.bf16.gmra.mrb[0].mxu0 %v79
    %v191 = vpop.f32.mrb[0].mxu0
    %v192 = vadd.f32 0.0, %v191
    %v193 = vpop.f32.mrb[0].mxu0
    %v194 = vpop.f32.mrb[0].mxu0
    %v195 = vadd.f32 0.0, %v194
    %v196 = vpop.f32.mrb[0].mxu0
    %197 = vmatprep.mubr.bf16.mxu0 0
    %198 = vmatmul.mubr.bf16.gmra.mrb[0].mxu0 %v80
    %v199 = vpop.f32.mrb[0].mxu0
    %v200 = vadd.f32 0.0, %v199
    %v201 = vpop.f32.mrb[0].mxu0
    %v202 = vpop.f32.mrb[0].mxu0
    %v203 = vadd.f32 0.0, %v202
    %v204 = vpop.f32.mrb[0].mxu0
    %205 = vmatprep.mubr.bf16.mxu0 0
    %206 = vmatmul.mubr.bf16.gmra.mrb[0].mxu0 %v81
    %v207 = vpop.f32.mrb[0].mxu0
    %v208 = vadd.f32 0.0, %v207
    %v209 = vpop.f32.mrb[0].mxu0
    %v210 = vpop.f32.mrb[0].mxu0
    %v211 = vadd.f32 0.0, %v210
    %v212 = vpop.f32.mrb[0].mxu0
    %213 = vmatprep.mubr.bf16.mxu0 0
    %214 = vmatmul.mubr.bf16.gmra.mrb[0].mxu0 %v82
    %v215 = vpop.f32.mrb[0].mxu0
    %v216 = vadd.f32 0.0, %v215
    %v217 = vpop.f32.mrb[0].mxu0
    %v218 = vpop.f32.mrb[0].mxu0
    %v219 = vadd.f32 0.0, %v218
    %v220 = vpop.f32.mrb[0].mxu0
    %221 = vmatprep.mubr.bf16.mxu0 0
    %222 = vmatmul.mubr.bf16.gmra.mrb[0].mxu0 %v83
    %v223 = vpop.f32.mrb[0].mxu0
    %v224 = vadd.f32 0.0, %v223
    %v225 = vpop.f32.mrb[0].mxu0
    %v226 = vpop.f32.mrb[0].mxu0
    %v227 = vadd.f32 0.0, %v226
    %v228 = vpop.f32.mrb[0].mxu0
    %229 = vmatprep.mubr.bf16.mxu0 0
    %230 = vmatmul.mubr.bf16.gmra.mrb[0].mxu0 %v84
    %v231 = vpop.f32.mrb[0].mxu0
    %v232 = vadd.f32 0.0, %v231
    %v233 = vpop.f32.mrb[0].mxu0
    %v234 = vpop.f32.mrb[0].mxu0
    %v235 = vadd.f32 0.0, %v234
    %v236 = vpop.f32.mrb[0].mxu0
    %237 = vdwg.mxu0
    %v238 = vsub.f32 %v176, 2.0
    %v239 = vsub.f32 %v179, 2.0
    %v240 = vsub.f32 %v184, 2.0
    %v241 = vsub.f32 %v187, 2.0
    %v242 = vsub.f32 %v192, 2.0
    %v243 = vsub.f32 %v195, 2.0
    %v244 = vsub.f32 %v200, 2.0
    %v245 = vsub.f32 %v203, 2.0
    %v246 = vsub.f32 %v208, 2.0
    %v247 = vsub.f32 %v211, 2.0
    %v248 = vsub.f32 %v216, 2.0
    %v249 = vsub.f32 %v219, 2.0
    %v250 = vsub.f32 %v224, 2.0
    %v251 = vsub.f32 %v227, 2.0
    %v252 = vsub.f32 %v232, 2.0
    %v253 = vsub.f32 %v235, 2.0
    %v254 = vmul.f32 %v238, %v238
    %v255 = vmul.f32 %v239, %v239
    %v256 = vmul.f32 %v240, %v240
    %v257 = vmul.f32 %v241, %v241
    %v258 = vmul.f32 %v242, %v242
    %v259 = vmul.f32 %v243, %v243
    %v260 = vmul.f32 %v244, %v244
    %v261 = vmul.f32 %v245, %v245
    %v262 = vmul.f32 %v246, %v246
    %v263 = vmul.f32 %v247, %v247
    %v264 = vmul.f32 %v248, %v248
    %v265 = vmul.f32 %v249, %v249
    %v266 = vmul.f32 %v250, %v250
    %v267 = vmul.f32 %v251, %v251
    %v268 = vmul.f32 %v252, %v252
    %v269 = vmul.f32 %v253, %v253
    %v270 = vmul.f32 %v254, -1.0
    %v271 = vmul.f32 %v255, -1.0
    %v272 = vmul.f32 %v256, -1.0
    %v273 = vmul.f32 %v257, -1.0
    %v274 = vmul.f32 %v258, -1.0
    %v275 = vmul.f32 %v259, -1.0
    %v276 = vmul.f32 %v260, -1.0
    %v277 = vmul.f32 %v261, -1.0
    %v278 = vmul.f32 %v262, -1.0
    %v279 = vmul.f32 %v263, -1.0
    %v280 = vmul.f32 %v264, -1.0
    %v281 = vmul.f32 %v265, -1.0
    %v282 = vmul.f32 %v266, -1.0
    %v283 = vmul.f32 %v267, -1.0
    %v284 = vmul.f32 %v268, -1.0
    %v285 = vmul.f32 %v269, -1.0
    %v286 = vmul.f32 %v270, 1.442695
    %v287 = vpow.pop %v286
    %v288 = vmul.f32 %v271, 1.442695
    %v289 = vpow.pop %v288
    %v290 = vmul.f32 %v272, 1.442695
    %v291 = vpow.pop %v290
    %v292 = vmul.f32 %v273, 1.442695
    %v293 = vpow.pop %v292
    %v294 = vmul.f32 %v274, 1.442695
    %v295 = vpow.pop %v294
    %v296 = vmul.f32 %v275, 1.442695
    %v297 = vpow.pop %v296
    %v298 = vmul.f32 %v276, 1.442695
    %v299 = vpow.pop %v298
    %v300 = vmul.f32 %v277, 1.442695
    %v301 = vpow.pop %v300
    %v302 = vmul.f32 %v278, 1.442695
    %v303 = vpow.pop %v302
    %v304 = vmul.f32 %v279, 1.442695
    %v305 = vpow.pop %v304
    %v306 = vmul.f32 %v280, 1.442695
    %v307 = vpow.pop %v306
    %v308 = vmul.f32 %v281, 1.442695
    %v309 = vpow.pop %v308
    %v310 = vmul.f32 %v282, 1.442695
    %v311 = vpow.pop %v310
    %v312 = vmul.f32 %v283, 1.442695
    %v313 = vpow.pop %v312
    %v314 = vmul.f32 %v284, 1.442695
    %v315 = vpow.pop %v314
    %v316 = vmul.f32 %v285, 1.442695
    %v317 = vpow.pop %v316
    %v318 = vmul.f32 %v287, 1.1
    %v319 = vmul.f32 %v289, 1.1
    %v320 = vmul.f32 %v291, 1.1
    %v321 = vmul.f32 %v293, 1.1
    %v322 = vmul.f32 %v295, 1.1
    %v323 = vmul.f32 %v297, 1.1
    %v324 = vmul.f32 %v299, 1.1
    %v325 = vmul.f32 %v301, 1.1
    %v326 = vmul.f32 %v303, 1.1
    %v327 = vmul.f32 %v305, 1.1
    %v328 = vmul.f32 %v307, 1.1
    %v329 = vmul.f32 %v309, 1.1
    %v330 = vmul.f32 %v311, 1.1
    %v331 = vmul.f32 %v313, 1.1
    %v332 = vmul.f32 %v315, 1.1
    %v333 = vmul.f32 %v317, 1.1
    %v334 = vmul.f32 %v287, 0.1
    %v335 = vmul.f32 %v289, 0.1
    %v336 = vmul.f32 %v291, 0.1
    %v337 = vmul.f32 %v293, 0.1
    %v338 = vmul.f32 %v295, 0.1
    %v339 = vmul.f32 %v297, 0.1
    %v340 = vmul.f32 %v299, 0.1
    %v341 = vmul.f32 %v301, 0.1
    %v342 = vmul.f32 %v303, 0.1
    %v343 = vmul.f32 %v305, 0.1
    %v344 = vmul.f32 %v307, 0.1
    %v345 = vmul.f32 %v309, 0.1
    %v346 = vmul.f32 %v311, 0.1
    %v347 = vmul.f32 %v313, 0.1
    %v348 = vmul.f32 %v315, 0.1
    %v349 = vmul.f32 %v317, 0.1
    %v350 = vadd.f32 %v334, 1.0
    %v351 = vadd.f32 %v335, 1.0
    %v352 = vadd.f32 %v336, 1.0
    %v353 = vadd.f32 %v337, 1.0
    %v354 = vadd.f32 %v338, 1.0
    %v355 = vadd.f32 %v339, 1.0
    %v356 = vadd.f32 %v340, 1.0
    %v357 = vadd.f32 %v341, 1.0
    %v358 = vadd.f32 %v342, 1.0
    %v359 = vadd.f32 %v343, 1.0
    %v360 = vadd.f32 %v344, 1.0
    %v361 = vadd.f32 %v345, 1.0
    %v362 = vadd.f32 %v346, 1.0
    %v363 = vadd.f32 %v347, 1.0
    %v364 = vadd.f32 %v348, 1.0
    %v365 = vadd.f32 %v349, 1.0
    %vm366 = vcmp.lt.f32.partialorder %v176, 2.0
    %vm367 = vcmp.lt.f32.partialorder %v179, 2.0
    %vm368 = vcmp.lt.f32.partialorder %v184, 2.0
    %vm369 = vcmp.lt.f32.partialorder %v187, 2.0
    %vm370 = vcmp.lt.f32.partialorder %v192, 2.0
    %vm371 = vcmp.lt.f32.partialorder %v195, 2.0
    %vm372 = vcmp.lt.f32.partialorder %v200, 2.0
    %vm373 = vcmp.lt.f32.partialorder %v203, 2.0
    %vm374 = vcmp.lt.f32.partialorder %v208, 2.0
    %vm375 = vcmp.lt.f32.partialorder %v211, 2.0
    %vm376 = vcmp.lt.f32.partialorder %v216, 2.0
    %vm377 = vcmp.lt.f32.partialorder %v219, 2.0
    %vm378 = vcmp.lt.f32.partialorder %v224, 2.0
    %vm379 = vcmp.lt.f32.partialorder %v227, 2.0
    %vm380 = vcmp.lt.f32.partialorder %v232, 2.0
    %vm381 = vcmp.lt.f32.partialorder %v235, 2.0
    %v382 = vsel %vm366, %v318, %v350
    %v383 = vsel %vm367, %v319, %v351
    %v384 = vsel %vm368, %v320, %v352
    %v385 = vsel %vm369, %v321, %v353
    %v386 = vsel %vm370, %v322, %v354
    %v387 = vsel %vm371, %v323, %v355
    %v388 = vsel %vm372, %v324, %v356
    %v389 = vsel %vm373, %v325, %v357
    %v390 = vsel %vm374, %v326, %v358
    %v391 = vsel %vm375, %v327, %v359
    %v392 = vsel %vm376, %v328, %v360
    %v393 = vsel %vm377, %v329, %v361
    %v394 = vsel %vm378, %v330, %v362
    %v395 = vsel %vm379, %v331, %v363
    %v396 = vsel %vm380, %v332, %v364
    %v397 = vsel %vm381, %v333, %v365
    %414 = vrot.lane.b32.xlu0 %v382, 96
    %v415 = vpop.permute.xlu0 %414
    %416 = vrot.lane.b32.xlu0 %v383, 96
    %v417 = vpop.permute.xlu0 %416
    %418 = vrot.lane.b32.xlu0 %v384, 96
    %v419 = vpop.permute.xlu0 %418
    %420 = vrot.lane.b32.xlu0 %v385, 96
    %v421 = vpop.permute.xlu0 %420
    %422 = vrot.lane.b32.xlu0 %v386, 96
    %v423 = vpop.permute.xlu0 %422
    %424 = vrot.lane.b32.xlu0 %v387, 96
    %v425 = vpop.permute.xlu0 %424
    %426 = vrot.lane.b32.xlu0 %v388, 96
    %v427 = vpop.permute.xlu0 %426
    %428 = vrot.lane.b32.xlu0 %v389, 96
    %v429 = vpop.permute.xlu0 %428
    %430 = vrot.lane.b32.xlu0 %v390, 96
    %v431 = vpop.permute.xlu0 %430
    %432 = vrot.lane.b32.xlu0 %v391, 96
    %v433 = vpop.permute.xlu0 %432
    %434 = vrot.lane.b32.xlu0 %v392, 96
    %v435 = vpop.permute.xlu0 %434
    %436 = vrot.lane.b32.xlu0 %v393, 96
    %v437 = vpop.permute.xlu0 %436
    %438 = vrot.lane.b32.xlu0 %v394, 96
    %v439 = vpop.permute.xlu0 %438
    %440 = vrot.lane.b32.xlu0 %v395, 96
    %v441 = vpop.permute.xlu0 %440
    %442 = vrot.lane.b32.xlu0 %v396, 96
    %v443 = vpop.permute.xlu0 %442
    %444 = vrot.lane.b32.xlu0 %v397, 96
    %v445 = vpop.permute.xlu0 %444
    %v462 = vmul.f32 %v176, %v415
    %v463 = vmul.f32 %v179, %v417
    %v464 = vmul.f32 %v184, %v419
    %v465 = vmul.f32 %v187, %v421
    %v466 = vmul.f32 %v192, %v423
    %v467 = vmul.f32 %v195, %v425
    %v468 = vmul.f32 %v200, %v427
    %v469 = vmul.f32 %v203, %v429
    %v470 = vmul.f32 %v208, %v431
    %v471 = vmul.f32 %v211, %v433
    %v472 = vmul.f32 %v216, %v435
    %v473 = vmul.f32 %v219, %v437
    %v474 = vmul.f32 %v224, %v439
    %v475 = vmul.f32 %v227, %v441
    %v476 = vmul.f32 %v232, %v443
    %v477 = vmul.f32 %v235, %v445
    %v478 = vmax.f32 %v176, 0.0
    %v479 = vmax.f32 %v179, 0.0
    %v480 = vmax.f32 %v184, 0.0
    %v481 = vmax.f32 %v187, 0.0
    %v482 = vmax.f32 %v192, 0.0
    %v483 = vmax.f32 %v195, 0.0
    %v484 = vmax.f32 %v200, 0.0
    %v485 = vmax.f32 %v203, 0.0
    %v486 = vmax.f32 %v208, 0.0
    %v487 = vmax.f32 %v211, 0.0
    %v488 = vmax.f32 %v216, 0.0
    %v489 = vmax.f32 %v219, 0.0
    %v490 = vmax.f32 %v224, 0.0
    %v491 = vmax.f32 %v227, 0.0
    %v492 = vmax.f32 %v232, 0.0
    %v493 = vmax.f32 %v235, 0.0
    %vm494 = vcmp.gt.f32.partialorder %v478, 0.0
    %vm495 = vcmp.gt.f32.partialorder %v479, 0.0
    %vm496 = vcmp.gt.f32.partialorder %v480, 0.0
    %vm497 = vcmp.gt.f32.partialorder %v481, 0.0
    %vm498 = vcmp.gt.f32.partialorder %v482, 0.0
    %vm499 = vcmp.gt.f32.partialorder %v483, 0.0
    %vm500 = vcmp.gt.f32.partialorder %v484, 0.0
    %vm501 = vcmp.gt.f32.partialorder %v485, 0.0
    %vm502 = vcmp.gt.f32.partialorder %v486, 0.0
    %vm503 = vcmp.gt.f32.partialorder %v487, 0.0
    %vm504 = vcmp.gt.f32.partialorder %v488, 0.0
    %vm505 = vcmp.gt.f32.partialorder %v489, 0.0
    %vm506 = vcmp.gt.f32.partialorder %v490, 0.0
    %vm507 = vcmp.gt.f32.partialorder %v491, 0.0
    %vm508 = vcmp.gt.f32.partialorder %v492, 0.0
    %vm509 = vcmp.gt.f32.partialorder %v493, 0.0
    %v510 = vmax.f32 %v478, 1e-30
    %v511 = vmax.f32 %v479, 1e-30
    %v512 = vmax.f32 %v480, 1e-30
    %v513 = vmax.f32 %v481, 1e-30
    %v514 = vmax.f32 %v482, 1e-30
    %v515 = vmax.f32 %v483, 1e-30
    %v516 = vmax.f32 %v484, 1e-30
    %v517 = vmax.f32 %v485, 1e-30
    %v518 = vmax.f32 %v486, 1e-30
    %v519 = vmax.f32 %v487, 1e-30
    %v520 = vmax.f32 %v488, 1e-30
    %v521 = vmax.f32 %v489, 1e-30
    %v522 = vmax.f32 %v490, 1e-30
    %v523 = vmax.f32 %v491, 1e-30
    %v524 = vmax.f32 %v492, 1e-30
    %v525 = vmax.f32 %v493, 1e-30
    %v526 = vlog2.pop %v510
    %v527 = vmul.f32 %v526, 0.6931472
    %v528 = vlog2.pop %v511
    %v529 = vmul.f32 %v528, 0.6931472
    %v530 = vlog2.pop %v512
    %v531 = vmul.f32 %v530, 0.6931472
    %v532 = vlog2.pop %v513
    %v533 = vmul.f32 %v532, 0.6931472
    %v534 = vlog2.pop %v514
    %v535 = vmul.f32 %v534, 0.6931472
    %v536 = vlog2.pop %v515
    %v537 = vmul.f32 %v536, 0.6931472
    %v538 = vlog2.pop %v516
    %v539 = vmul.f32 %v538, 0.6931472
    %v540 = vlog2.pop %v517
    %v541 = vmul.f32 %v540, 0.6931472
    %v542 = vlog2.pop %v518
    %v543 = vmul.f32 %v542, 0.6931472
    %v544 = vlog2.pop %v519
    %v545 = vmul.f32 %v544, 0.6931472
    %v546 = vlog2.pop %v520
    %v547 = vmul.f32 %v546, 0.6931472
    %v548 = vlog2.pop %v521
    %v549 = vmul.f32 %v548, 0.6931472
    %v550 = vlog2.pop %v522
    %v551 = vmul.f32 %v550, 0.6931472
    %v552 = vlog2.pop %v523
    %v553 = vmul.f32 %v552, 0.6931472
    %v554 = vlog2.pop %v524
    %v555 = vmul.f32 %v554, 0.6931472
    %v556 = vlog2.pop %v525
    %v557 = vmul.f32 %v556, 0.6931472
    %v558 = vmul.f32 %v527, 0.8
    %v559 = vmul.f32 %v529, 0.8
    %v560 = vmul.f32 %v531, 0.8
    %v561 = vmul.f32 %v533, 0.8
    %v562 = vmul.f32 %v535, 0.8
    %v563 = vmul.f32 %v537, 0.8
    %v564 = vmul.f32 %v539, 0.8
    %v565 = vmul.f32 %v541, 0.8
    %v566 = vmul.f32 %v543, 0.8
    %v567 = vmul.f32 %v545, 0.8
    %v568 = vmul.f32 %v547, 0.8
    %v569 = vmul.f32 %v549, 0.8
    %v570 = vmul.f32 %v551, 0.8
    %v571 = vmul.f32 %v553, 0.8
    %v572 = vmul.f32 %v555, 0.8
    %v573 = vmul.f32 %v557, 0.8
    %v574 = vmul.f32 %v558, 1.442695
    %v575 = vpow.pop %v574
    %v576 = vmul.f32 %v559, 1.442695
    %v577 = vpow.pop %v576
    %v578 = vmul.f32 %v560, 1.442695
    %v579 = vpow.pop %v578
    %v580 = vmul.f32 %v561, 1.442695
    %v581 = vpow.pop %v580
    %v582 = vmul.f32 %v562, 1.442695
    %v583 = vpow.pop %v582
    %v584 = vmul.f32 %v563, 1.442695
    %v585 = vpow.pop %v584
    %v586 = vmul.f32 %v564, 1.442695
    %v587 = vpow.pop %v586
    %v588 = vmul.f32 %v565, 1.442695
    %v589 = vpow.pop %v588
    %v590 = vmul.f32 %v566, 1.442695
    %v591 = vpow.pop %v590
    %v592 = vmul.f32 %v567, 1.442695
    %v593 = vpow.pop %v592
    %v594 = vmul.f32 %v568, 1.442695
    %v595 = vpow.pop %v594
    %v596 = vmul.f32 %v569, 1.442695
    %v597 = vpow.pop %v596
    %v598 = vmul.f32 %v570, 1.442695
    %v599 = vpow.pop %v598
    %v600 = vmul.f32 %v571, 1.442695
    %v601 = vpow.pop %v600
    %v602 = vmul.f32 %v572, 1.442695
    %v603 = vpow.pop %v602
    %v604 = vmul.f32 %v573, 1.442695
    %v605 = vpow.pop %v604
    %v606 = vsel %vm494, %v575, 0.0
    %v607 = vsel %vm495, %v577, 0.0
    %v608 = vsel %vm496, %v579, 0.0
    %v609 = vsel %vm497, %v581, 0.0
    %v610 = vsel %vm498, %v583, 0.0
    %v611 = vsel %vm499, %v585, 0.0
    %v612 = vsel %vm500, %v587, 0.0
    %v613 = vsel %vm501, %v589, 0.0
    %v614 = vsel %vm502, %v591, 0.0
    %v615 = vsel %vm503, %v593, 0.0
    %v616 = vsel %vm504, %v595, 0.0
    %v617 = vsel %vm505, %v597, 0.0
    %v618 = vsel %vm506, %v599, 0.0
    %v619 = vsel %vm507, %v601, 0.0
    %v620 = vsel %vm508, %v603, 0.0
    %v621 = vsel %vm509, %v605, 0.0
    %vm622 = vcmp.ge.f32.partialorder %v462, 0.0
    %vm623 = vcmp.ge.f32.partialorder %v463, 0.0
    %vm624 = vcmp.ge.f32.partialorder %v464, 0.0
    %vm625 = vcmp.ge.f32.partialorder %v465, 0.0
    %vm626 = vcmp.ge.f32.partialorder %v466, 0.0
    %vm627 = vcmp.ge.f32.partialorder %v467, 0.0
    %vm628 = vcmp.ge.f32.partialorder %v468, 0.0
    %vm629 = vcmp.ge.f32.partialorder %v469, 0.0
    %vm630 = vcmp.ge.f32.partialorder %v470, 0.0
    %vm631 = vcmp.ge.f32.partialorder %v471, 0.0
    %vm632 = vcmp.ge.f32.partialorder %v472, 0.0
    %vm633 = vcmp.ge.f32.partialorder %v473, 0.0
    %vm634 = vcmp.ge.f32.partialorder %v474, 0.0
    %vm635 = vcmp.ge.f32.partialorder %v475, 0.0
    %vm636 = vcmp.ge.f32.partialorder %v476, 0.0
    %vm637 = vcmp.ge.f32.partialorder %v477, 0.0
    %v638 = vmul.f32 %v462, 0.2
    %v639 = vmul.f32 %v463, 0.2
    %v640 = vmul.f32 %v464, 0.2
    %v641 = vmul.f32 %v465, 0.2
    %v642 = vmul.f32 %v466, 0.2
    %v643 = vmul.f32 %v467, 0.2
    %v644 = vmul.f32 %v468, 0.2
    %v645 = vmul.f32 %v469, 0.2
    %v646 = vmul.f32 %v470, 0.2
    %v647 = vmul.f32 %v471, 0.2
    %v648 = vmul.f32 %v472, 0.2
    %v649 = vmul.f32 %v473, 0.2
    %v650 = vmul.f32 %v474, 0.2
    %v651 = vmul.f32 %v475, 0.2
    %v652 = vmul.f32 %v476, 0.2
    %v653 = vmul.f32 %v477, 0.2
    %v654 = vsel %vm622, %v462, %v638
    %v655 = vsel %vm623, %v463, %v639
    %v656 = vsel %vm624, %v464, %v640
    %v657 = vsel %vm625, %v465, %v641
    %v658 = vsel %vm626, %v466, %v642
    %v659 = vsel %vm627, %v467, %v643
    %v660 = vsel %vm628, %v468, %v644
    %v661 = vsel %vm629, %v469, %v645
    %v662 = vsel %vm630, %v470, %v646
    %v663 = vsel %vm631, %v471, %v647
    %v664 = vsel %vm632, %v472, %v648
    %v665 = vsel %vm633, %v473, %v649
    %v666 = vsel %vm634, %v474, %v650
    %v667 = vsel %vm635, %v475, %v651
    %v668 = vsel %vm636, %v476, %v652
    %v669 = vsel %vm637, %v477, %v653
    %686 = vrot.lane.b32.xlu0 %v176, 64
    %v687 = vpop.permute.xlu0 %686
    %688 = vrot.lane.b32.xlu0 %v179, 64
    %v689 = vpop.permute.xlu0 %688
    %690 = vrot.lane.b32.xlu0 %v184, 64
    %v691 = vpop.permute.xlu0 %690
    %692 = vrot.lane.b32.xlu0 %v187, 64
    %v693 = vpop.permute.xlu0 %692
    %694 = vrot.lane.b32.xlu0 %v192, 64
    %v695 = vpop.permute.xlu0 %694
    %696 = vrot.lane.b32.xlu0 %v195, 64
    %v697 = vpop.permute.xlu0 %696
    %698 = vrot.lane.b32.xlu0 %v200, 64
    %v699 = vpop.permute.xlu0 %698
    %700 = vrot.lane.b32.xlu0 %v203, 64
    %v701 = vpop.permute.xlu0 %700
    %702 = vrot.lane.b32.xlu0 %v208, 64
    %v703 = vpop.permute.xlu0 %702
    %704 = vrot.lane.b32.xlu0 %v211, 64
    %v705 = vpop.permute.xlu0 %704
    %706 = vrot.lane.b32.xlu0 %v216, 64
    %v707 = vpop.permute.xlu0 %706
    %708 = vrot.lane.b32.xlu0 %v219, 64
    %v709 = vpop.permute.xlu0 %708
    %710 = vrot.lane.b32.xlu0 %v224, 64
    %v711 = vpop.permute.xlu0 %710
    %712 = vrot.lane.b32.xlu0 %v227, 64
    %v713 = vpop.permute.xlu0 %712
    %714 = vrot.lane.b32.xlu0 %v232, 64
    %v715 = vpop.permute.xlu0 %714
    %716 = vrot.lane.b32.xlu0 %v235, 64
    %v717 = vpop.permute.xlu0 %716
    %734 = vrot.lane.b32.xlu0 %v382, 64
    %v735 = vpop.permute.xlu0 %734
    %736 = vrot.lane.b32.xlu0 %v383, 64
    %v737 = vpop.permute.xlu0 %736
    %738 = vrot.lane.b32.xlu0 %v384, 64
    %v739 = vpop.permute.xlu0 %738
    %740 = vrot.lane.b32.xlu0 %v385, 64
    %v741 = vpop.permute.xlu0 %740
    %742 = vrot.lane.b32.xlu0 %v386, 64
    %v743 = vpop.permute.xlu0 %742
    %744 = vrot.lane.b32.xlu0 %v387, 64
    %v745 = vpop.permute.xlu0 %744
    %746 = vrot.lane.b32.xlu0 %v388, 64
    %v747 = vpop.permute.xlu0 %746
    %748 = vrot.lane.b32.xlu0 %v389, 64
    %v749 = vpop.permute.xlu0 %748
    %750 = vrot.lane.b32.xlu0 %v390, 64
    %v751 = vpop.permute.xlu0 %750
    %752 = vrot.lane.b32.xlu0 %v391, 64
    %v753 = vpop.permute.xlu0 %752
    %754 = vrot.lane.b32.xlu0 %v392, 64
    %v755 = vpop.permute.xlu0 %754
    %756 = vrot.lane.b32.xlu0 %v393, 64
    %v757 = vpop.permute.xlu0 %756
    %758 = vrot.lane.b32.xlu0 %v394, 64
    %v759 = vpop.permute.xlu0 %758
    %760 = vrot.lane.b32.xlu0 %v395, 64
    %v761 = vpop.permute.xlu0 %760
    %762 = vrot.lane.b32.xlu0 %v396, 64
    %v763 = vpop.permute.xlu0 %762
    %764 = vrot.lane.b32.xlu0 %v397, 64
    %v765 = vpop.permute.xlu0 %764
    %vm782 = vcmask 261120
    %v783 = vsel %vm782, %v654, %v606
    %v784 = vsel %vm782, %v655, %v607
    %v785 = vsel %vm782, %v656, %v608
    %v786 = vsel %vm782, %v657, %v609
    %v787 = vsel %vm782, %v658, %v610
    %v788 = vsel %vm782, %v659, %v611
    %v789 = vsel %vm782, %v660, %v612
    %v790 = vsel %vm782, %v661, %v613
    %v791 = vsel %vm782, %v662, %v614
    %v792 = vsel %vm782, %v663, %v615
    %v793 = vsel %vm782, %v664, %v616
    %v794 = vsel %vm782, %v665, %v617
    %v795 = vsel %vm782, %v666, %v618
    %v796 = vsel %vm782, %v667, %v619
    %v797 = vsel %vm782, %v668, %v620
    %v798 = vsel %vm782, %v669, %v621
    %vm799 = vcmask 523264
    %v800 = vsel %vm799, %v783, %v687
    %v801 = vsel %vm799, %v784, %v689
    %v802 = vsel %vm799, %v785, %v691
    %v803 = vsel %vm799, %v786, %v693
    %v804 = vsel %vm799, %v787, %v695
    %v805 = vsel %vm799, %v788, %v697
    %v806 = vsel %vm799, %v789, %v699
    %v807 = vsel %vm799, %v790, %v701
    %v808 = vsel %vm799, %v791, %v703
    %v809 = vsel %vm799, %v792, %v705
    %v810 = vsel %vm799, %v793, %v707
    %v811 = vsel %vm799, %v794, %v709
    %v812 = vsel %vm799, %v795, %v711
    %v813 = vsel %vm799, %v796, %v713
    %v814 = vsel %vm799, %v797, %v715
    %v815 = vsel %vm799, %v798, %v717
    %vm816 = vcmask 785408
    %v817 = vsel %vm816, %v800, %v735
    %v818 = vsel %vm816, %v801, %v737
    %v819 = vsel %vm816, %v802, %v739
    %v820 = vsel %vm816, %v803, %v741
    %v821 = vsel %vm816, %v804, %v743
    %v822 = vsel %vm816, %v805, %v745
    %v823 = vsel %vm816, %v806, %v747
    %v824 = vsel %vm816, %v807, %v749
    %v825 = vsel %vm816, %v808, %v751
    %v826 = vsel %vm816, %v809, %v753
    %v827 = vsel %vm816, %v810, %v755
    %v828 = vsel %vm816, %v811, %v757
    %v829 = vsel %vm816, %v812, %v759
    %v830 = vsel %vm816, %v813, %v761
    %v831 = vsel %vm816, %v814, %v763
    %v832 = vsel %vm816, %v815, %v765
    %833 = vst [vmem:[#allocation2] sm:$0xff] %v817
    %834 = vst [vmem:[#allocation2 + $0x8] sm:$0xff] %v818
    %835 = vst [vmem:[#allocation2 + $0x10] sm:$0xff] %v819
    %836 = vst [vmem:[#allocation2 + $0x18] sm:$0xff] %v820
    %837 = vst [vmem:[#allocation2 + $0x20] sm:$0xff] %v821
    %838 = vst [vmem:[#allocation2 + $0x28] sm:$0xff] %v822
    %839 = vst [vmem:[#allocation2 + $0x30] sm:$0xff] %v823
    %840 = vst [vmem:[#allocation2 + $0x38] sm:$0xff] %v824
    %841 = vst [vmem:[#allocation2 + $0x40] sm:$0xff] %v825
    %842 = vst [vmem:[#allocation2 + $0x48] sm:$0xff] %v826
    %843 = vst [vmem:[#allocation2 + $0x50] sm:$0xff] %v827
    %844 = vst [vmem:[#allocation2 + $0x58] sm:$0xff] %v828
    %845 = vst [vmem:[#allocation2 + $0x60] sm:$0xff] %v829
    %846 = vst [vmem:[#allocation2 + $0x68] sm:$0xff] %v830
    %847 = vst [vmem:[#allocation2 + $0x70] sm:$0xff] %v831
    %848 = vst [vmem:[#allocation2 + $0x78] sm:$0xff] %v832
    // Predicated region
    $region10: #{tpu_custom_call.1} parent=1 // pred_check
      _
    $region11: #{tpu_custom_call.1} parent=1 // pred_check_branch
      %850 = sbr.rel (0) target = $region13
    $region12: #{tpu_custom_call.1} parent=1 // pred_region
      %s852 = ssub.s32 2048, 2048
      %853 = vsyncadd [#allocation3], %s852
      %s854 = sshll.u32 [#allocation2], 4
      %s855 = int_to_ptr.vmem [resolvable:$true] %s854
      %860 = dma.vmem_to_hbm [thread:$0]  %s855, 2048, %s2, [#allocation3], 128, 128, 8
    $region13: #{tpu_custom_call.1} parent=1 // pred_fallthru
      _
    // Predicated region
    $region14: #{tpu_custom_call.1} parent=1 // pred_check
      _
    $region15: #{tpu_custom_call.1} parent=1 // pred_check_branch
      %862 = sbr.rel (0) target = $region17
    $region16: #{tpu_custom_call.1} parent=1 // pred_region
      %863 = dma.done [#allocation3], 2048
    $region17: #{tpu_custom_call.1} parent=1 // pred_fallthru
      _
    %864 = vsyncpa [#allocation3], 1

</llo_original>
